<compile_context>
chip_gen: v6e
topology: v6e:2x2x1
jax: 0.10.0
libtpu: 0.0.40
codegen_flags: <defaults>
</compile_context>

<pallas_src>
import functools

import jax
import jax.numpy as jnp
from jax.experimental import pallas as pl
from jax.experimental.pallas import tpu as pltpu


def _round_up(v, m):
    return ((v + m - 1) // m) * m


def _leaky_relu(v, slope=0.2):
    return jnp.where(v > 0, v, slope * v)


def make_decoder_kernel(K_pad, off_aux, off_w2, off_wo, P):
    """Build the kernel body with static slab offsets baked in."""

    def kernel(xp_ref, slab_ref, out_ref):
        xp = xp_ref[...]                                  # (tb, K_pad)  fp32
        w1 = slab_ref[0:K_pad, :]                         # (K_pad, P)   x|prob weights
        aux = slab_ref[off_aux:off_aux + 8, :]            # (8, P) packed bias rows
        bc = aux[0:1, :]                                  # b1 + bp (folded)
        b2 = aux[1:2, :]
        bo = aux[2:3, :]
        w2 = slab_ref[off_w2:off_w2 + P, :]               # (P, P)
        wo = slab_ref[off_wo:off_wo + P, :]               # (P, P)

        # lin_1(x) + lin_prob(prob): prob is column L of xp and wp is row L
        # of w1, so a single MXU pass covers both; biases pre-folded into bc.
        h = _leaky_relu(
            jnp.dot(xp, w1, preferred_element_type=jnp.float32) + bc
        )                                                 # (tb, P)

        # lin_2
        h = _leaky_relu(
            jnp.dot(h, w2, preferred_element_type=jnp.float32) + b2
        )                                                 # (tb, P)

        # lin_out + sigmoid (padded lanes hold sigmoid(0)=0.5; sliced away
        # in the wrapper).
        logits = jnp.dot(h, wo, preferred_element_type=jnp.float32) + bo
        out_ref[...] = jax.nn.sigmoid(logits).astype(out_ref.dtype)

    return kernel


def pack_decoder_params(params):
    """Pack all weights/biases into ONE lane-dense (rows, P) fp32 slab.

    Called ONCE (outside the per-call jit path).  Row layout (8-row aligned):
      [0        : K_pad     )  W1ext: rows 0..L-1 = lin_1 weight,
                                row L = lin_prob weight row, rest zero
      [K_pad    : K_pad + 8 )  aux rows: 0 = b1+bp (folded), 1 = b2, 2 = bo
      [K_pad+8  : +P        )  W2  (lin_2 weight, zero-padded to (P, P))
      [...      : +P        )  Wo  (lin_out weight, zero-padded to (P, P))
    """
    w1, b1, wp, bp, w2, b2, wo, bo = params
    L, H = w1.shape
    O = wo.shape[1]
    K_pad = _round_up(L + 1, 8)
    P = max(_round_up(H, 128), _round_up(O, 128))

    def pad2(a, rows, cols):
        a = a.astype(jnp.float32)
        return jnp.pad(a, ((0, rows - a.shape[0]), (0, cols - a.shape[1])))

    w1ext = jnp.zeros((K_pad, P), jnp.float32)
    w1ext = w1ext.at[:L, :H].set(w1.astype(jnp.float32))
    w1ext = w1ext.at[L, :H].set(wp[0].astype(jnp.float32))     # lin_prob weight row

    aux = jnp.zeros((8, P), jnp.float32)
    aux = aux.at[0, :H].set((b1 + bp)[0].astype(jnp.float32))  # fold bp into b1
    aux = aux.at[1, :H].set(b2[0].astype(jnp.float32))
    aux = aux.at[2, :O].set(bo[0].astype(jnp.float32))

    slab = jnp.concatenate([w1ext, aux, pad2(w2, P, P), pad2(wo, P, P)], axis=0)
    return slab


@functools.partial(jax.jit, static_argnames=("output_dim",))
def decoder_forward(x, prob, slab, *, output_dim):
    """Decoder forward pass as a single Pallas TPU kernel (slab pre-packed)."""
    B, L = x.shape
    K = L + 1                                   # x columns + prob column
    K_pad = _round_up(K, 8)
    P = slab.shape[1]
    total_rows = slab.shape[0]
    off_aux = K_pad
    off_w2 = K_pad + 8
    off_wo = off_w2 + P
    assert total_rows == off_wo + P, "slab layout mismatch"

    # Batch tiling: cap the tile so VMEM stays bounded at any B, keep it
    # 8-aligned, and pad the batch to a multiple of the tile.  Large batches
    # get >=2 grid steps (v7x dual-TC sharding); small batches are 1 step.
    TB_MAX = 1024
    tb = min(TB_MAX, _round_up(B, 8))
    B_pad = _round_up(B, tb)
    grid = (B_pad // tb,)

    # Fold prob into the MXU operand and pad (columns to K_pad, rows to B_pad).
    pieces = [x.astype(jnp.float32), prob.astype(jnp.float32)]
    if K_pad > K:
        pieces.append(jnp.zeros((B, K_pad - K), jnp.float32))
    xp = jnp.concatenate(pieces, axis=1)
    if B_pad != B:
        xp = jnp.pad(xp, ((0, B_pad - B), (0, 0)))

    kernel = make_decoder_kernel(K_pad, off_aux, off_w2, off_wo, P)

    cost = pl.CostEstimate(
        flops=int(2 * B_pad * P * (K_pad + 2 * P)),
        transcendentals=int(B_pad * P),
        bytes_accessed=int(4 * (B_pad * K_pad + total_rows * P + B_pad * P)),
    )

    out_pad = pl.pallas_call(
        kernel,
        out_shape=jax.ShapeDtypeStruct((B_pad, P), jnp.float32),
        grid=grid,
        in_specs=[
            pl.BlockSpec((tb, K_pad), lambda i: (i, 0), memory_space=pltpu.VMEM),
            # Constant index map: slab fetched once, resident across the grid.
            pl.BlockSpec((total_rows, P), lambda i: (0, 0),
                         memory_space=pltpu.VMEM),
        ],
        out_specs=pl.BlockSpec((tb, P), lambda i: (i, 0),
                               memory_space=pltpu.VMEM),
        compiler_params=pltpu.CompilerParams(
            dimension_semantics=("parallel",)),
        cost_estimate=cost,
    )(xp, slab)

    # Slice the real (B, O) result out of the lane-dense padded store.
    return out_pad[:B, :output_dim]


def init_decoder_params(key, latent_dim, hidden_dim, output_dim):
    """Deterministic, PyTorch-Linear-style uniform init. Weights stored (in, out)."""
    def linear(k, fan_in, fan_out):
        kw, kb = jax.random.split(k)
        bound = 1.0 / jnp.sqrt(jnp.asarray(fan_in, jnp.float32))
        w = jax.random.uniform(kw, (fan_in, fan_out), jnp.float32, -bound, bound)
        b = jax.random.uniform(kb, (1, fan_out), jnp.float32, -bound, bound)
        return w, b

    k1, k2, k3, k4 = jax.random.split(key, 4)
    w1, b1 = linear(k1, latent_dim, hidden_dim)   # lin_1
    wp, bp = linear(k2, 1, hidden_dim)            # lin_prob
    w2, b2 = linear(k3, hidden_dim, hidden_dim)   # lin_2
    wo, bo = linear(k4, hidden_dim, output_dim)   # lin_out
    return (w1, b1, wp, bp, w2, b2, wo, bo)


def decoder_reference(x, prob, params):
    """Pure-JAX reference for correctness checking."""
    w1, b1, wp, bp, w2, b2, wo, bo = params
    lrelu = lambda v: jnp.where(v > 0, v, 0.2 * v)
    h = lrelu(x @ w1 + b1 + prob @ wp + bp)
    h = lrelu(h @ w2 + b2)
    return jax.nn.sigmoid(h @ wo + bo)


if __name__ == "__main__":
    latent_dim, hidden_dim, output_dim = 8, 32, 16
    batch = 2

    key = jax.random.PRNGKey(0)
    kx, kp, kparams = jax.random.split(key, 3)

    x = jax.random.normal(kx, (batch, latent_dim), jnp.float32)
    prob = jax.random.uniform(kp, (batch, 1), jnp.float32)
    params = init_decoder_params(kparams, latent_dim, hidden_dim, output_dim)

    # Pack the weight slab ONCE, outside the per-call jit path.
    slab = jax.block_until_ready(pack_decoder_params(params))

    out = decoder_forward(x, prob, slab, output_dim=output_dim)
    out = jax.block_until_ready(out)

    ref = decoder_reference(x, prob, params)
    assert out.shape == (batch, output_dim)
    assert jnp.allclose(out, ref, atol=1e-5, rtol=1e-5), "mismatch vs reference"

    # Extra check: exercise the multi-step, padded-batch path (grid > 1).
    big_b = 2500
    kx2, kp2 = jax.random.split(jax.random.PRNGKey(1))
    x2 = jax.random.normal(kx2, (big_b, latent_dim), jnp.float32)
    prob2 = jax.random.uniform(kp2, (big_b, 1), jnp.float32)
    out2 = jax.block_until_ready(
        decoder_forward(x2, prob2, slab, output_dim=output_dim))
    ref2 = decoder_reference(x2, prob2, params)
    assert out2.shape == (big_b, output_dim)
    assert jnp.allclose(out2, ref2, atol=1e-5, rtol=1e-5), "mismatch (big batch)"

    print("KERNEL_OK")
</pallas_src>

<mosaic_0001>
module attributes {stable_mosaic.version = 11 : i64} {
  func.func @kernel(%arg0: i32, %arg1: memref<8x16xf32, #tpu.memory_space<vmem>>, %arg2: memref<280x128xf32, #tpu.memory_space<vmem>>, %arg3: memref<8x128xf32, #tpu.memory_space<vmem>>) attributes {dimension_semantics = [#tpu.dimension_semantics<parallel>], iteration_bounds = array<i64: 1>, scalar_prefetch = 0 : i64, scratch_operands = 0 : i64, tpu.core_type = #tpu.core_type<tc>, window_params = [{transform_indices = @transform_0, window_bounds = array<i64: 8, 16>}, {pipeline_mode = #tpu.pipeline_mode<synchronous>, transform_indices = @transform_1, window_bounds = array<i64: 280, 128>}, {transform_indices = @transform_2, window_bounds = array<i64: 8, 128>}]} {
    %c0 = arith.constant 0 : index
    %c0_0 = arith.constant 0 : index
    %0 = vector.load %arg1[%c0, %c0_0] : memref<8x16xf32, #tpu.memory_space<vmem>>, vector<8x16xf32>
    %c0_1 = arith.constant 0 : index
    %c0_2 = arith.constant 0 : index
    %1 = vector.load %arg2[%c0_1, %c0_2] : memref<280x128xf32, #tpu.memory_space<vmem>>, vector<16x128xf32>
    %c16 = arith.constant 16 : index
    %c0_3 = arith.constant 0 : index
    %2 = vector.load %arg2[%c16, %c0_3] : memref<280x128xf32, #tpu.memory_space<vmem>>, vector<8x128xf32>
    %3 = vector.extract_strided_slice %2 {offsets = [0, 0], sizes = [1, 128], strides = [1, 1]} : vector<8x128xf32> to vector<1x128xf32>
    %4 = vector.extract_strided_slice %2 {offsets = [1, 0], sizes = [1, 128], strides = [1, 1]} : vector<8x128xf32> to vector<1x128xf32>
    %5 = vector.extract_strided_slice %2 {offsets = [2, 0], sizes = [1, 128], strides = [1, 1]} : vector<8x128xf32> to vector<1x128xf32>
    %c24 = arith.constant 24 : index
    %c0_4 = arith.constant 0 : index
    %6 = vector.load %arg2[%c24, %c0_4] : memref<280x128xf32, #tpu.memory_space<vmem>>, vector<128x128xf32>
    %c152 = arith.constant 152 : index
    %c0_5 = arith.constant 0 : index
    %7 = vector.load %arg2[%c152, %c0_5] : memref<280x128xf32, #tpu.memory_space<vmem>>, vector<128x128xf32>
    %cst = arith.constant dense<0.000000e+00> : vector<8x128xf32>
    %8 = tpu.matmul %0, %1, %cst {dimension_numbers = #tpu.dot_dimension_numbers<[1], [0], [0], [1], [0, 0, 1, 1], [], []>} : vector<8x16xf32>, vector<16x128xf32>, vector<8x128xf32> -> vector<8x128xf32>
    %9 = vector.broadcast %3 : vector<1x128xf32> to vector<8x128xf32>
    %10 = arith.addf %8, %9 : vector<8x128xf32>
    %cst_6 = arith.constant 0.000000e+00 : f32
    %11 = vector.broadcast %cst_6 : f32 to vector<8x128xf32>
    %12 = arith.cmpf ogt, %10, %11 : vector<8x128xf32>
    %cst_7 = arith.constant 2.000000e-01 : f32
    %13 = vector.broadcast %cst_7 : f32 to vector<8x128xf32>
    %14 = arith.mulf %13, %10 : vector<8x128xf32>
    %15 = arith.select %12, %10, %14 : vector<8x128xi1>, vector<8x128xf32>
    %cst_8 = arith.constant dense<0.000000e+00> : vector<8x128xf32>
    %16 = tpu.matmul %15, %6, %cst_8 {dimension_numbers = #tpu.dot_dimension_numbers<[1], [0], [0], [1], [0, 0, 1, 1], [], []>} : vector<8x128xf32>, vector<128x128xf32>, vector<8x128xf32> -> vector<8x128xf32>
    %17 = vector.broadcast %4 : vector<1x128xf32> to vector<8x128xf32>
    %18 = arith.addf %16, %17 : vector<8x128xf32>
    %cst_9 = arith.constant 0.000000e+00 : f32
    %19 = vector.broadcast %cst_9 : f32 to vector<8x128xf32>
    %20 = arith.cmpf ogt, %18, %19 : vector<8x128xf32>
    %cst_10 = arith.constant 2.000000e-01 : f32
    %21 = vector.broadcast %cst_10 : f32 to vector<8x128xf32>
    %22 = arith.mulf %21, %18 : vector<8x128xf32>
    %23 = arith.select %20, %18, %22 : vector<8x128xi1>, vector<8x128xf32>
    %cst_11 = arith.constant dense<0.000000e+00> : vector<8x128xf32>
    %24 = tpu.matmul %23, %7, %cst_11 {dimension_numbers = #tpu.dot_dimension_numbers<[1], [0], [0], [1], [0, 0, 1, 1], [], []>} : vector<8x128xf32>, vector<128x128xf32>, vector<8x128xf32> -> vector<8x128xf32>
    %25 = vector.broadcast %5 : vector<1x128xf32> to vector<8x128xf32>
    %26 = arith.addf %24, %25 : vector<8x128xf32>
    %27 = arith.negf %26 : vector<8x128xf32>
    %28 = math.exp %27 : vector<8x128xf32>
    %cst_12 = arith.constant 1.000000e+00 : f32
    %29 = vector.broadcast %cst_12 : f32 to vector<8x128xf32>
    %30 = arith.addf %29, %28 : vector<8x128xf32>
    %31 = arith.divf %29, %30 : vector<8x128xf32>
    %c0_13 = arith.constant 0 : index
    %c0_14 = arith.constant 0 : index
    %32 = vector.load %arg3[%c0_13, %c0_14] : memref<8x128xf32, #tpu.memory_space<vmem>>, vector<8x128xf32>
    tpu.vector_store %arg3[%c0_13, %c0_14], %31 {strides = array<i32>} : memref<8x128xf32, #tpu.memory_space<vmem>>, vector<8x128xf32>,
    return
  }
  func.func @transform_0(%arg0: i32) -> (i32, i32) {
    %c0_i32 = arith.constant 0 : i32
    %c0_i32_0 = arith.constant 0 : i32
    return %arg0, %c0_i32 : i32, i32
  }
  func.func @transform_1(%arg0: i32) -> (i32, i32) {
    %c0_i32 = arith.constant 0 : i32
    %c0_i32_0 = arith.constant 0 : i32
    %c0_i32_1 = arith.constant 0 : i32
    return %c0_i32, %c0_i32_0 : i32, i32
  }
  func.func @transform_2(%arg0: i32) -> (i32, i32) {
    %c0_i32 = arith.constant 0 : i32
    %c0_i32_0 = arith.constant 0 : i32
    return %arg0, %c0_i32 : i32, i32
  }
}

</mosaic_0001>

<llo_original>
// kernel: decoder_forward.1
$region0: #{decoder_forward.1}
  #allocation0 [shape = 'u32[]', space=smem, size = 0x4, offset = 0x4, fixed_abs, tag = 'smem constant byte address 0x4 - core index']
  #allocation1 [shape = 'u32[144,128]{1,0:T(1,128)}', space=vmem, size = 0x12000, scoped, tag = 'internal scratch']
  %s0 = inlined_call_operand.vmem [shape: f32[8,16], index: 0, kind: input, shape index: {}]
  %s1 = inlined_call_operand.hbm [shape: f32[280,128], index: 1, kind: input, shape index: {}]
  %s2 = inlined_call_operand.vmem [shape: f32[8,128], index: 2, kind: output, shape index: {}]
  %s3 = sld [smem:[#allocation0]]
  $region22: #{decoder_forward.1} parent=0
    _
  %s5 = ssub.s32 1, %s3
  %s6 = scalar_select 0, %s5, %s3
  $region1: #{decoder_forward.1} parent=0
    #allocation2 [shape = 'u8[143360]{0}', space=vmem, size = 0x23000, scoped, tag = 'input window, operand 1, single buffered']
    #allocation3 [shape = 's32[1]{0}', space=sflag, size = 0x4, scoped, tag = 'scoped memory for decoder_forward.1']
    %7 = vsyncpa [#allocation3], 0
    // Predicated region
    $region2: #{decoder_forward.1} parent=1 // pred_check
      _
    $region3: #{decoder_forward.1} parent=1 // pred_check_branch
      %9 = sbr.rel (0) target = $region5
    $region4: #{decoder_forward.1} parent=1 // pred_region
      _
    $region5: #{decoder_forward.1} parent=1 // pred_fallthru
      _
    // Predicated region
    $region6: #{decoder_forward.1} parent=1 // pred_check
      _
    $region7: #{decoder_forward.1} parent=1 // pred_check_branch
      %11 = sbr.rel (0) target = $region9
    $region8: #{decoder_forward.1} parent=1 // pred_region
      %s13 = ssub.s32 4480, 4480
      %14 = vsyncadd [#allocation3], %s13
      %s15 = sshll.u32 [#allocation2], 4
      %s16 = int_to_ptr.vmem [resolvable:$true] %s15
      %21 = dma.hbm_to_vmem [thread:$0]  %s1, 4480, %s16, [#allocation3], 128, 128, 8
    $region9: #{decoder_forward.1} parent=1 // pred_fallthru
      _
    // Predicated region
    $region10: #{decoder_forward.1} parent=1 // pred_check
      _
    $region11: #{decoder_forward.1} parent=1 // pred_check_branch
      %23 = sbr.rel (0) target = $region13
    $region12: #{decoder_forward.1} parent=1 // pred_region
      %24 = dma.done [#allocation3], 4480
    $region13: #{decoder_forward.1} parent=1 // pred_fallthru
      _
    %v25 = vld [vmem:[%s0] sm:$0xff]
    %v26 = vld [vmem:[#allocation2] sm:$0xff]
    %v27 = vld [vmem:[#allocation2 + $0x8] sm:$0xff]
    %v28 = vld [vmem:[#allocation2 + $0x10] sm:$0xff]
    %v29 = vld [vmem:[#allocation2 + $0x18] sm:$0xff]
    %v30 = vld [vmem:[#allocation2 + $0x20] sm:$0xff]
    %v31 = vld [vmem:[#allocation2 + $0x28] sm:$0xff]
    %v32 = vld [vmem:[#allocation2 + $0x30] sm:$0xff]
    %v33 = vld [vmem:[#allocation2 + $0x38] sm:$0xff]
    %v34 = vld [vmem:[#allocation2 + $0x40] sm:$0xff]
    %v35 = vld [vmem:[#allocation2 + $0x48] sm:$0xff]
    %v36 = vld [vmem:[#allocation2 + $0x50] sm:$0xff]
    %v37 = vld [vmem:[#allocation2 + $0x58] sm:$0xff]
    %v38 = vld [vmem:[#allocation2 + $0x60] sm:$0xff]
    %v39 = vld [vmem:[#allocation2 + $0x68] sm:$0xff]
    %v40 = vld [vmem:[#allocation2 + $0x70] sm:$0xff]
    %v41 = vld [vmem:[#allocation2 + $0x78] sm:$0xff]
    %v42 = vld [vmem:[#allocation2 + $0x80] sm:$0xff]
    %v43 = vld [vmem:[#allocation2 + $0x88] sm:$0xff]
    %v44 = vld [vmem:[#allocation2 + $0x90] sm:$0xff]
    %v45 = vld [vmem:[#allocation2 + $0x98] sm:$0xff]
    %v46 = vld [vmem:[#allocation2 + $0xa0] sm:$0xff]
    %v47 = vld [vmem:[#allocation2 + $0xa8] sm:$0xff]
    %v48 = vld [vmem:[#allocation2 + $0xb0] sm:$0xff]
    %v49 = vld [vmem:[#allocation2 + $0xb8] sm:$0xff]
    %v50 = vld [vmem:[#allocation2 + $0xc0] sm:$0xff]
    %v51 = vld [vmem:[#allocation2 + $0xc8] sm:$0xff]
    %v52 = vld [vmem:[#allocation2 + $0xd0] sm:$0xff]
    %v53 = vld [vmem:[#allocation2 + $0xd8] sm:$0xff]
    %v54 = vld [vmem:[#allocation2 + $0xe0] sm:$0xff]
    %v55 = vld [vmem:[#allocation2 + $0xe8] sm:$0xff]
    %v56 = vld [vmem:[#allocation2 + $0xf0] sm:$0xff]
    %v57 = vld [vmem:[#allocation2 + $0xf8] sm:$0xff]
    %v58 = vld [vmem:[#allocation2 + $0x100] sm:$0xff]
    %v59 = vld [vmem:[#allocation2 + $0x108] sm:$0xff]
    %v60 = vld [vmem:[#allocation2 + $0x110] sm:$0xff]
    %v61 = vlaneseq
    %v62 = vshrl.u32 %v61, 7
    %v63 = vsub.s32 0, %v62
    %v64 = vrot.slane %v28, %v63
    %vm65 = vcmask 130048
    %v67 = vsel %vm65, %v25, 0
    %69 = vmatprep.subr.mxu0 0.0
    %70 = vmatpush1.msra.mxu0 0.0
    %71 = vmatprep.subr.mxu0 0.0
    %72 = vmatpush1.msra.mxu0 0.0
    %73 = vmatprep.subr.mxu0 0.0
    %74 = vmatpush1.msra.mxu0 0.0
    %75 = vmatprep.subr.mxu0 0.0
    %76 = vmatpush1.msra.mxu0 0.0
    %77 = vmatprep.subr.mxu0 0.0
    %78 = vmatpush1.msra.mxu0 0.0
    %79 = vmatprep.subr.mxu0 0.0
    %80 = vmatpush1.msra.mxu0 0.0
    %81 = vmatprep.subr.mxu0 0.0
    %82 = vmatpush1.msra.mxu0 0.0
    %83 = vmatprep.subr.mxu0 0.0
    %84 = vmatpush1.msra.mxu0 0.0
    %85 = vmatprep.subr.mxu0 0.0
    %86 = vmatpush1.msra.mxu0 0.0
    %87 = vmatprep.subr.mxu0 0.0
    %88 = vmatpush1.msra.mxu0 0.0
    %89 = vmatprep.subr.mxu0 0.0
    %90 = vmatpush1.msra.mxu0 0.0
    %91 = vmatprep.subr.mxu0 0.0
    %92 = vmatpush1.msra.mxu0 0.0
    %93 = vmatprep.subr.mxu0 0.0
    %94 = vmatpush1.msra.mxu0 0.0
    %95 = vmatprep.subr.mxu0 0.0
    %96 = vmatpush1.msra.mxu0 0.0
    %97 = vmatprep.subr.mxu0 0.0
    %98 = vmatpush1.msra.mxu0 %v27
    %99 = vmatprep.subr.mxu0 0.0
    %100 = vmatpush1.msra.mxu0 %v26
    %101 = vmatprep.subr.mxu0 0.0
    %102 = vmatpush2.msra.mxu0 0.0
    %103 = vmatprep.subr.mxu0 0.0
    %104 = vmatpush2.msra.mxu0 0.0
    %105 = vmatprep.subr.mxu0 0.0
    %106 = vmatpush2.msra.mxu0 0.0
    %107 = vmatprep.subr.mxu0 0.0
    %108 = vmatpush2.msra.mxu0 0.0
    %109 = vmatprep.subr.mxu0 0.0
    %110 = vmatpush2.msra.mxu0 0.0
    %111 = vmatprep.subr.mxu0 0.0
    %112 = vmatpush2.msra.mxu0 0.0
    %113 = vmatprep.subr.mxu0 0.0
    %114 = vmatpush2.msra.mxu0 0.0
    %115 = vmatprep.subr.mxu0 0.0
    %116 = vmatpush2.msra.mxu0 0.0
    %117 = vmatprep.subr.mxu0 0.0
    %118 = vmatpush2.msra.mxu0 0.0
    %119 = vmatprep.subr.mxu0 0.0
    %120 = vmatpush2.msra.mxu0 0.0
    %121 = vmatprep.subr.mxu0 0.0
    %122 = vmatpush2.msra.mxu0 0.0
    %123 = vmatprep.subr.mxu0 0.0
    %124 = vmatpush2.msra.mxu0 0.0
    %125 = vmatprep.subr.mxu0 0.0
    %126 = vmatpush2.msra.mxu0 0.0
    %127 = vmatprep.subr.mxu0 0.0
    %128 = vmatpush2.msra.mxu0 0.0
    %129 = vmatprep.subr.mxu0 0.0
    %130 = vmatpush2.msra.mxu0 0.0
    %131 = vmatprep.subr.mxu0 0.0
    %132 = vmatpush2.msra.mxu0 0.0
    %133 = vmatprep.mubr.f32.mxu0 0.0
    %134 = vmatmul.mubr.f32.gmra.mxu0 %v67
    %v135 = vpop.f32.mrf.mxu0
    %v136 = vadd.f32 %v64, %v135
    %v137 = vpop.f32.mrf.mxu0
    %138 = vdwg.mxu0
    %vm139 = vcmp.gt.f32.partialorder %v136, 0.0
    %v140 = vmul.f32 %v136, 0.2
    %v141 = vsel %vm139, %v136, %v140
    %v142 = vlaneseq
    %v143 = vshrl.u32 %v142, 7
    %v144 = vsub.s32 1, %v143
    %v145 = vrot.slane %v28, %v144
    %146 = vmatprep.subr.mxu0 0.0
    %147 = vmatpush1.msra.mxu0 %v44
    %148 = vmatprep.subr.mxu0 0.0
    %149 = vmatpush1.msra.mxu0 %v43
    %150 = vmatprep.subr.mxu0 0.0
    %151 = vmatpush1.msra.mxu0 %v42
    %152 = vmatprep.subr.mxu0 0.0
    %153 = vmatpush1.msra.mxu0 %v41
    %154 = vmatprep.subr.mxu0 0.0
    %155 = vmatpush1.msra.mxu0 %v40
    %156 = vmatprep.subr.mxu0 0.0
    %157 = vmatpush1.msra.mxu0 %v39
    %158 = vmatprep.subr.mxu0 0.0
    %159 = vmatpush1.msra.mxu0 %v38
    %160 = vmatprep.subr.mxu0 0.0
    %161 = vmatpush1.msra.mxu0 %v37
    %162 = vmatprep.subr.mxu0 0.0
    %163 = vmatpush1.msra.mxu0 %v36
    %164 = vmatprep.subr.mxu0 0.0
    %165 = vmatpush1.msra.mxu0 %v35
    %166 = vmatprep.subr.mxu0 0.0
    %167 = vmatpush1.msra.mxu0 %v34
    %168 = vmatprep.subr.mxu0 0.0
    %169 = vmatpush1.msra.mxu0 %v33
    %170 = vmatprep.subr.mxu0 0.0
    %171 = vmatpush1.msra.mxu0 %v32
    %172 = vmatprep.subr.mxu0 0.0
    %173 = vmatpush1.msra.mxu0 %v31
    %174 = vmatprep.subr.mxu0 0.0
    %175 = vmatpush1.msra.mxu0 %v30
    %176 = vmatprep.subr.mxu0 0.0
    %177 = vmatpush1.msra.mxu0 %v29
    %178 = vmatprep.subr.mxu0 0.0
    %179 = vmatpush2.msra.mxu0 0.0
    %180 = vmatprep.subr.mxu0 0.0
    %181 = vmatpush2.msra.mxu0 0.0
    %182 = vmatprep.subr.mxu0 0.0
    %183 = vmatpush2.msra.mxu0 0.0
    %184 = vmatprep.subr.mxu0 0.0
    %185 = vmatpush2.msra.mxu0 0.0
    %186 = vmatprep.subr.mxu0 0.0
    %187 = vmatpush2.msra.mxu0 0.0
    %188 = vmatprep.subr.mxu0 0.0
    %189 = vmatpush2.msra.mxu0 0.0
    %190 = vmatprep.subr.mxu0 0.0
    %191 = vmatpush2.msra.mxu0 0.0
    %192 = vmatprep.subr.mxu0 0.0
    %193 = vmatpush2.msra.mxu0 0.0
    %194 = vmatprep.subr.mxu0 0.0
    %195 = vmatpush2.msra.mxu0 0.0
    %196 = vmatprep.subr.mxu0 0.0
    %197 = vmatpush2.msra.mxu0 0.0
    %198 = vmatprep.subr.mxu0 0.0
    %199 = vmatpush2.msra.mxu0 0.0
    %200 = vmatprep.subr.mxu0 0.0
    %201 = vmatpush2.msra.mxu0 0.0
    %202 = vmatprep.subr.mxu0 0.0
    %203 = vmatpush2.msra.mxu0 0.0
    %204 = vmatprep.subr.mxu0 0.0
    %205 = vmatpush2.msra.mxu0 0.0
    %206 = vmatprep.subr.mxu0 0.0
    %207 = vmatpush2.msra.mxu0 0.0
    %208 = vmatprep.subr.mxu0 0.0
    %209 = vmatpush2.msra.mxu0 0.0
    %210 = vmatprep.mubr.f32.mxu0 0.0
    %211 = vmatmul.mubr.f32.gmra.mxu0 %v141
    %v212 = vpop.f32.mrf.mxu0
    %v213 = vadd.f32 %v145, %v212
    %v214 = vpop.f32.mrf.mxu0
    %215 = vdwg.mxu0
    %vm216 = vcmp.gt.f32.partialorder %v213, 0.0
    %v217 = vmul.f32 %v213, 0.2
    %v218 = vsel %vm216, %v213, %v217
    %v219 = vlaneseq
    %v220 = vshrl.u32 %v219, 7
    %v221 = vsub.s32 2, %v220
    %v222 = vrot.slane %v28, %v221
    %223 = vmatprep.subr.mxu0 0.0
    %224 = vmatpush1.msra.mxu0 %v60
    %225 = vmatprep.subr.mxu0 0.0
    %226 = vmatpush1.msra.mxu0 %v59
    %227 = vmatprep.subr.mxu0 0.0
    %228 = vmatpush1.msra.mxu0 %v58
    %229 = vmatprep.subr.mxu0 0.0
    %230 = vmatpush1.msra.mxu0 %v57
    %231 = vmatprep.subr.mxu0 0.0
    %232 = vmatpush1.msra.mxu0 %v56
    %233 = vmatprep.subr.mxu0 0.0
    %234 = vmatpush1.msra.mxu0 %v55
    %235 = vmatprep.subr.mxu0 0.0
    %236 = vmatpush1.msra.mxu0 %v54
    %237 = vmatprep.subr.mxu0 0.0
    %238 = vmatpush1.msra.mxu0 %v53
    %239 = vmatprep.subr.mxu0 0.0
    %240 = vmatpush1.msra.mxu0 %v52
    %241 = vmatprep.subr.mxu0 0.0
    %242 = vmatpush1.msra.mxu0 %v51
    %243 = vmatprep.subr.mxu0 0.0
    %244 = vmatpush1.msra.mxu0 %v50
    %245 = vmatprep.subr.mxu0 0.0
    %246 = vmatpush1.msra.mxu0 %v49
    %247 = vmatprep.subr.mxu0 0.0
    %248 = vmatpush1.msra.mxu0 %v48
    %249 = vmatprep.subr.mxu0 0.0
    %250 = vmatpush1.msra.mxu0 %v47
    %251 = vmatprep.subr.mxu0 0.0
    %252 = vmatpush1.msra.mxu0 %v46
    %253 = vmatprep.subr.mxu0 0.0
    %254 = vmatpush1.msra.mxu0 %v45
    %255 = vmatprep.subr.mxu0 0.0
    %256 = vmatpush2.msra.mxu0 0.0
    %257 = vmatprep.subr.mxu0 0.0
    %258 = vmatpush2.msra.mxu0 0.0
    %259 = vmatprep.subr.mxu0 0.0
    %260 = vmatpush2.msra.mxu0 0.0
    %261 = vmatprep.subr.mxu0 0.0
    %262 = vmatpush2.msra.mxu0 0.0
    %263 = vmatprep.subr.mxu0 0.0
    %264 = vmatpush2.msra.mxu0 0.0
    %265 = vmatprep.subr.mxu0 0.0
    %266 = vmatpush2.msra.mxu0 0.0
    %267 = vmatprep.subr.mxu0 0.0
    %268 = vmatpush2.msra.mxu0 0.0
    %269 = vmatprep.subr.mxu0 0.0
    %270 = vmatpush2.msra.mxu0 0.0
    %271 = vmatprep.subr.mxu0 0.0
    %272 = vmatpush2.msra.mxu0 0.0
    %273 = vmatprep.subr.mxu0 0.0
    %274 = vmatpush2.msra.mxu0 0.0
    %275 = vmatprep.subr.mxu0 0.0
    %276 = vmatpush2.msra.mxu0 0.0
    %277 = vmatprep.subr.mxu0 0.0
    %278 = vmatpush2.msra.mxu0 0.0
    %279 = vmatprep.subr.mxu0 0.0
    %280 = vmatpush2.msra.mxu0 0.0
    %281 = vmatprep.subr.mxu0 0.0
    %282 = vmatpush2.msra.mxu0 0.0
    %283 = vmatprep.subr.mxu0 0.0
    %284 = vmatpush2.msra.mxu0 0.0
    %285 = vmatprep.subr.mxu0 0.0
    %286 = vmatpush2.msra.mxu0 0.0
    %287 = vmatprep.mubr.f32.mxu0 0.0
    %288 = vmatmul.mubr.f32.gmra.mxu0 %v218
    %v289 = vpop.f32.mrf.mxu0
    %v290 = vadd.f32 %v222, %v289
    %v291 = vpop.f32.mrf.mxu0
    %292 = vdwg.mxu0
    %v293 = vxor.u32 %v290, 2147483648
    %v294 = vmul.f32 %v293, 1.442695
    %v295 = vpow.pop %v294
    %v296 = vadd.f32 %v295, 1.0
    %v297 = vrcp.pop %v296
    %v298 = vmul.f32 1.0, %v297
    %299 = vst [vmem:[%s2] sm:$0xff] %v298
    // Predicated region
    $region14: #{decoder_forward.1} parent=1 // pred_check
      _
    $region15: #{decoder_forward.1} parent=1 // pred_check_branch
      %301 = sbr.rel (0) target = $region17
    $region16: #{decoder_forward.1} parent=1 // pred_region
      _
    $region17: #{decoder_forward.1} parent=1 // pred_fallthru
      _
    // Predicated region
    $region18: #{decoder_forward.1} parent=1 // pred_check
      _
    $region19: #{decoder_forward.1} parent=1 // pred_check_branch
      %303 = sbr.rel (0) target = $region21
    $region20: #{decoder_forward.1} parent=1 // pred_region
      _
    $region21: #{decoder_forward.1} parent=1 // pred_fallthru
      _
    %304 = vsyncpa [#allocation3], 1

</llo_original>
